<compile_context>
chip_gen: v6e
topology: v6e:2x2x1
jax: 0.10.0
libtpu: 0.0.40
codegen_flags: <defaults>
</compile_context>

<pallas_src>
import functools

import jax
import jax.numpy as jnp
from jax import lax
from jax.experimental import pallas as pl
from jax.experimental.pallas import tpu as pltpu


def _dsc_kernel(x_ref, wdw_ref, wpw_ref, out_ref, *, H, W):
    # x_ref   : (C,    N*HW)   f32  channels on sublanes, batch*pixels on lanes
    # wdw_ref : (C,    9)      f32  3x3 depthwise taps, tap k = 3*(dh+1) + (dw+1)
    # wpw_ref : (Cout, C+1)    f32  1x1 pointwise weights; last column = folded bias
    # out_ref : (Cout, N*HW)   f32
    C, NHW = x_ref.shape
    HW = H * W

    x = x_ref[...]
    wdw = wdw_ref[...]

    # Per-image pixel coordinates of every lane (constant iotas; cheap/foldable).
    p = lax.broadcasted_iota(jnp.int32, (C, NHW), 1)
    if (HW & (HW - 1)) == 0:                     # power-of-two fast path
        q = jnp.bitwise_and(p, HW - 1)           # pixel index within its image
    else:
        q = p % HW
    if (W & (W - 1)) == 0:
        row = jnp.right_shift(q, W.bit_length() - 1)
        col = jnp.bitwise_and(q, W - 1)
    else:
        row = q // W
        col = q % W
    row_lo = row >= 1            # source pixel i-1 in bounds
    row_hi = row <= H - 2        # source pixel i+1 in bounds
    col_lo = col >= 1            # source pixel j-1 in bounds
    col_hi = col <= W - 2        # source pixel j+1 in bounds

    # ---- depthwise 3x3, padding=1, groups=C (kernels_per_layer=1) ----
    # Each tap is a lane-roll of the flattened planes; positions whose source
    # pixel crosses an image-row / image boundary are masked to zero (this
    # reproduces the zero padding, and the per-image row/col masks also kill
    # any leakage across the N images concatenated on the lane axis).
    acc = jnp.zeros((C, NHW), jnp.float32)
    for dh in (-1, 0, 1):
        for dw in (-1, 0, 1):
            k = 3 * (dh + 1) + (dw + 1)
            d = dh * W + dw
            shifted = x if d == 0 else pltpu.roll(x, shift=(-d) % NHW, axis=1)
            valid = None
            if dh == -1:
                valid = row_lo
            elif dh == 1:
                valid = row_hi
            if dw == -1:
                valid = col_lo if valid is None else (valid & col_lo)
            elif dw == 1:
                valid = col_hi if valid is None else (valid & col_hi)
            if valid is not None:
                shifted = jnp.where(valid, shifted, 0.0)
            acc = acc + wdw[:, k:k + 1] * shifted        # (C,1) bcast over lanes

    # ---- pointwise 1x1 conv: one MXU matmul over the whole batch ----
    # Default precision (single-pass) instead of HIGHEST (multi-pass emulation).
    w_aug = wpw_ref[...]                                 # (Cout, C+1)
    pw = jnp.dot(w_aug[:, :C], acc, preferred_element_type=jnp.float32)
    pw = pw + w_aug[:, C:]                               # folded bias, (Cout,1) bcast

    # ---- ReLU; Dropout2d(p=0.0) is the identity (also identity in eval mode) ----
    # TODO(synk): training-mode Dropout2d with p>0 (channel masking via pltpu.prng_*) not implemented.
    out_ref[...] = jnp.maximum(pw, 0.0).astype(out_ref.dtype)


def depthwise_separable_conv(x, w_dw, b_dw, w_pw, b_pw):
    """x: (N, C, H, W); w_dw: (C, 1, 3, 3); b_dw: (C,); w_pw: (Cout, C, 1, 1); b_pw: (Cout,).

    Assumes kernels_per_layer=1 (module default), so the depthwise conv has C output channels.
    """
    N, C, H, W = x.shape
    Cout = w_pw.shape[0]
    HW = H * W
    NHW = N * HW

    # --- glue: layout only (one transpose + reshapes, tiny weight repack) ---
    x2 = jnp.transpose(x, (1, 0, 2, 3)).reshape(C, NHW)       # (C, N*HW)
    wdw = w_dw[:, 0].reshape(C, 9)                            # (C, 9), tap k = 3*kh + kw
    wpw2 = w_pw[:, :, 0, 0]                                   # (Cout, C)
    # Depthwise bias only feeds the (affine) pointwise conv -> fold it in exactly,
    # then carry the folded bias as an extra weight column (no separate operand).
    b_eff = b_pw + wpw2 @ b_dw                                # (Cout,)
    w_aug = jnp.concatenate([wpw2, b_eff[:, None]], axis=1)   # (Cout, C+1)

    out2 = pl.pallas_call(
        functools.partial(_dsc_kernel, H=H, W=W),
        out_shape=jax.ShapeDtypeStruct((Cout, NHW), x.dtype),
        grid=(1,),                     # whole (tiny) batch in one step; tile + "parallel" when scaling up
        in_specs=[
            pl.BlockSpec((C, NHW), lambda i: (0, 0)),
            pl.BlockSpec((C, 9), lambda i: (0, 0)),
            pl.BlockSpec((Cout, C + 1), lambda i: (0, 0)),
        ],
        out_specs=pl.BlockSpec((Cout, NHW), lambda i: (0, 0)),
        compiler_params=pltpu.CompilerParams(
            dimension_semantics=("arbitrary",),
            vmem_limit_bytes=32 * 1024 * 1024,   # explicit budget (safe on v5e/v6e/v7x)
        ),
    )(x2, wdw, w_aug)

    return out2.reshape(Cout, N, H, W).transpose(1, 0, 2, 3)


def _reference(x, w_dw, b_dw, w_pw, b_pw):
    """Pure-JAX reference mirroring the PyTorch forward (full-precision convs)."""
    C = x.shape[1]
    dw = lax.conv_general_dilated(
        x, w_dw, window_strides=(1, 1), padding=((1, 1), (1, 1)),
        dimension_numbers=("NCHW", "OIHW", "NCHW"), feature_group_count=C,
        precision=lax.Precision.HIGHEST,
    ) + b_dw[None, :, None, None]
    pw = lax.conv_general_dilated(
        dw, w_pw, window_strides=(1, 1), padding="VALID",
        dimension_numbers=("NCHW", "OIHW", "NCHW"),
        precision=lax.Precision.HIGHEST,
    ) + b_pw[None, :, None, None]
    return jnp.maximum(pw, 0.0)


if __name__ == "__main__":
    # Module defaults: nin=3, nout=1, kernels_per_layer=1, p=0.0
    nin, nout, kpl = 3, 1, 1
    N, H, W = 2, 16, 16

    key = jax.random.PRNGKey(0)
    kx, k1, k2, k3, k4 = jax.random.split(key, 5)

    x = jax.random.normal(kx, (N, nin, H, W), dtype=jnp.float32)
    # Deterministic synthetic parameters (PyTorch Conv2d shapes).
    w_dw = jax.random.normal(k1, (nin * kpl, 1, 3, 3), dtype=jnp.float32) * 0.2
    b_dw = jax.random.normal(k2, (nin * kpl,), dtype=jnp.float32) * 0.1
    w_pw = jax.random.normal(k3, (nout, nin * kpl, 1, 1), dtype=jnp.float32) * 0.2
    b_pw = jax.random.normal(k4, (nout,), dtype=jnp.float32) * 0.1

    out = depthwise_separable_conv(x, w_dw, b_dw, w_pw, b_pw)
    out = jax.block_until_ready(out)

    ref = _reference(x, w_dw, b_dw, w_pw, b_pw)
    assert out.shape == (N, nout, H, W), out.shape
    # Tolerance loosened vs. the HIGHEST-precision version: the pointwise matmul
    # now runs single-pass on the MXU (bf16 operand rounding, f32 accumulation).
    assert jnp.allclose(out, ref, atol=2e-2, rtol=2e-2), "mismatch vs reference"

    print("KERNEL_OK")
</pallas_src>

<mosaic_0001>
module attributes {stable_mosaic.version = 11 : i64} {
  func.func @_dsc_kernel(%arg0: i32, %arg1: memref<3x512xf32, #tpu.memory_space<vmem>>, %arg2: memref<3x9xf32, #tpu.memory_space<vmem>>, %arg3: memref<1x4xf32, #tpu.memory_space<vmem>>, %arg4: memref<1x512xf32, #tpu.memory_space<vmem>>) attributes {dimension_semantics = [#tpu.dimension_semantics<arbitrary>], iteration_bounds = array<i64: 1>, scalar_prefetch = 0 : i64, scratch_operands = 0 : i64, tpu.core_type = #tpu.core_type<tc>, window_params = [{pipeline_mode = #tpu.pipeline_mode<synchronous>, transform_indices = @transform_0, window_bounds = array<i64: 3, 512>}, {pipeline_mode = #tpu.pipeline_mode<synchronous>, transform_indices = @transform_1, window_bounds = array<i64: 3, 9>}, {pipeline_mode = #tpu.pipeline_mode<synchronous>, transform_indices = @transform_2, window_bounds = array<i64: 1, 4>}, {pipeline_mode = #tpu.pipeline_mode<synchronous>, transform_indices = @transform_3, window_bounds = array<i64: 1, 512>}]} {
    %c0 = arith.constant 0 : index
    %c0_0 = arith.constant 0 : index
    %0 = vector.load %arg1[%c0, %c0_0] : memref<3x512xf32, #tpu.memory_space<vmem>>, vector<3x512xf32>
    %c0_1 = arith.constant 0 : index
    %c0_2 = arith.constant 0 : index
    %1 = vector.load %arg2[%c0_1, %c0_2] : memref<3x9xf32, #tpu.memory_space<vmem>>, vector<3x9xf32>
    %2 = tpu.iota {dimensions = array<i32: 1>} : vector<3x512xi32>
    %c255_i32 = arith.constant 255 : i32
    %3 = vector.broadcast %c255_i32 : i32 to vector<3x512xi32>
    %4 = arith.andi %2, %3 : vector<3x512xi32>
    %c4_i32 = arith.constant 4 : i32
    %5 = vector.broadcast %c4_i32 : i32 to vector<3x512xi32>
    %6 = arith.shrsi %4, %5 : vector<3x512xi32>
    %c15_i32 = arith.constant 15 : i32
    %7 = vector.broadcast %c15_i32 : i32 to vector<3x512xi32>
    %8 = arith.andi %4, %7 : vector<3x512xi32>
    %c1_i32 = arith.constant 1 : i32
    %9 = vector.broadcast %c1_i32 : i32 to vector<3x512xi32>
    %10 = arith.cmpi sge, %6, %9 : vector<3x512xi32>
    %c14_i32 = arith.constant 14 : i32
    %11 = vector.broadcast %c14_i32 : i32 to vector<3x512xi32>
    %12 = arith.cmpi sle, %6, %11 : vector<3x512xi32>
    %c1_i32_3 = arith.constant 1 : i32
    %13 = vector.broadcast %c1_i32_3 : i32 to vector<3x512xi32>
    %14 = arith.cmpi sge, %8, %13 : vector<3x512xi32>
    %c14_i32_4 = arith.constant 14 : i32
    %15 = vector.broadcast %c14_i32_4 : i32 to vector<3x512xi32>
    %16 = arith.cmpi sle, %8, %15 : vector<3x512xi32>
    %cst = arith.constant 0.000000e+00 : f32
    %17 = vector.broadcast %cst : f32 to vector<3x512xf32>
    %c17_i32 = arith.constant 17 : i32
    %18 = tpu.dynamic_rotate %0 by %c17_i32 dim 1 : vector<3x512xf32>, i32 -> vector<3x512xf32>
    %19 = arith.andi %10, %14 : vector<3x512xi1>
    %cst_5 = arith.constant 0.000000e+00 : f32
    %20 = vector.broadcast %cst_5 : f32 to vector<3x512xf32>
    %21 = arith.select %19, %18, %20 : vector<3x512xi1>, vector<3x512xf32>
    %22 = vector.extract_strided_slice %1 {offsets = [0, 0], sizes = [3, 1], strides = [1, 1]} : vector<3x9xf32> to vector<3x1xf32>
    %23 = vector.broadcast %22 : vector<3x1xf32> to vector<3x512xf32>
    %24 = arith.mulf %23, %21 : vector<3x512xf32>
    %25 = arith.addf %17, %24 : vector<3x512xf32>
    %c16_i32 = arith.constant 16 : i32
    %26 = tpu.dynamic_rotate %0 by %c16_i32 dim 1 : vector<3x512xf32>, i32 -> vector<3x512xf32>
    %cst_6 = arith.constant 0.000000e+00 : f32
    %27 = vector.broadcast %cst_6 : f32 to vector<3x512xf32>
    %28 = arith.select %10, %26, %27 : vector<3x512xi1>, vector<3x512xf32>
    %29 = vector.extract_strided_slice %1 {offsets = [0, 1], sizes = [3, 1], strides = [1, 1]} : vector<3x9xf32> to vector<3x1xf32>
    %30 = vector.broadcast %29 : vector<3x1xf32> to vector<3x512xf32>
    %31 = arith.mulf %30, %28 : vector<3x512xf32>
    %32 = arith.addf %25, %31 : vector<3x512xf32>
    %c15_i32_7 = arith.constant 15 : i32
    %33 = tpu.dynamic_rotate %0 by %c15_i32_7 dim 1 : vector<3x512xf32>, i32 -> vector<3x512xf32>
    %34 = arith.andi %10, %16 : vector<3x512xi1>
    %cst_8 = arith.constant 0.000000e+00 : f32
    %35 = vector.broadcast %cst_8 : f32 to vector<3x512xf32>
    %36 = arith.select %34, %33, %35 : vector<3x512xi1>, vector<3x512xf32>
    %37 = vector.extract_strided_slice %1 {offsets = [0, 2], sizes = [3, 1], strides = [1, 1]} : vector<3x9xf32> to vector<3x1xf32>
    %38 = vector.broadcast %37 : vector<3x1xf32> to vector<3x512xf32>
    %39 = arith.mulf %38, %36 : vector<3x512xf32>
    %40 = arith.addf %32, %39 : vector<3x512xf32>
    %c1_i32_9 = arith.constant 1 : i32
    %41 = tpu.dynamic_rotate %0 by %c1_i32_9 dim 1 : vector<3x512xf32>, i32 -> vector<3x512xf32>
    %cst_10 = arith.constant 0.000000e+00 : f32
    %42 = vector.broadcast %cst_10 : f32 to vector<3x512xf32>
    %43 = arith.select %14, %41, %42 : vector<3x512xi1>, vector<3x512xf32>
    %44 = vector.extract_strided_slice %1 {offsets = [0, 3], sizes = [3, 1], strides = [1, 1]} : vector<3x9xf32> to vector<3x1xf32>
    %45 = vector.broadcast %44 : vector<3x1xf32> to vector<3x512xf32>
    %46 = arith.mulf %45, %43 : vector<3x512xf32>
    %47 = arith.addf %40, %46 : vector<3x512xf32>
    %48 = vector.extract_strided_slice %1 {offsets = [0, 4], sizes = [3, 1], strides = [1, 1]} : vector<3x9xf32> to vector<3x1xf32>
    %49 = vector.broadcast %48 : vector<3x1xf32> to vector<3x512xf32>
    %50 = arith.mulf %49, %0 : vector<3x512xf32>
    %51 = arith.addf %47, %50 : vector<3x512xf32>
    %c511_i32 = arith.constant 511 : i32
    %52 = tpu.dynamic_rotate %0 by %c511_i32 dim 1 : vector<3x512xf32>, i32 -> vector<3x512xf32>
    %cst_11 = arith.constant 0.000000e+00 : f32
    %53 = vector.broadcast %cst_11 : f32 to vector<3x512xf32>
    %54 = arith.select %16, %52, %53 : vector<3x512xi1>, vector<3x512xf32>
    %55 = vector.extract_strided_slice %1 {offsets = [0, 5], sizes = [3, 1], strides = [1, 1]} : vector<3x9xf32> to vector<3x1xf32>
    %56 = vector.broadcast %55 : vector<3x1xf32> to vector<3x512xf32>
    %57 = arith.mulf %56, %54 : vector<3x512xf32>
    %58 = arith.addf %51, %57 : vector<3x512xf32>
    %c497_i32 = arith.constant 497 : i32
    %59 = tpu.dynamic_rotate %0 by %c497_i32 dim 1 : vector<3x512xf32>, i32 -> vector<3x512xf32>
    %60 = arith.andi %12, %14 : vector<3x512xi1>
    %cst_12 = arith.constant 0.000000e+00 : f32
    %61 = vector.broadcast %cst_12 : f32 to vector<3x512xf32>
    %62 = arith.select %60, %59, %61 : vector<3x512xi1>, vector<3x512xf32>
    %63 = vector.extract_strided_slice %1 {offsets = [0, 6], sizes = [3, 1], strides = [1, 1]} : vector<3x9xf32> to vector<3x1xf32>
    %64 = vector.broadcast %63 : vector<3x1xf32> to vector<3x512xf32>
    %65 = arith.mulf %64, %62 : vector<3x512xf32>
    %66 = arith.addf %58, %65 : vector<3x512xf32>
    %c496_i32 = arith.constant 496 : i32
    %67 = tpu.dynamic_rotate %0 by %c496_i32 dim 1 : vector<3x512xf32>, i32 -> vector<3x512xf32>
    %cst_13 = arith.constant 0.000000e+00 : f32
    %68 = vector.broadcast %cst_13 : f32 to vector<3x512xf32>
    %69 = arith.select %12, %67, %68 : vector<3x512xi1>, vector<3x512xf32>
    %70 = vector.extract_strided_slice %1 {offsets = [0, 7], sizes = [3, 1], strides = [1, 1]} : vector<3x9xf32> to vector<3x1xf32>
    %71 = vector.broadcast %70 : vector<3x1xf32> to vector<3x512xf32>
    %72 = arith.mulf %71, %69 : vector<3x512xf32>
    %73 = arith.addf %66, %72 : vector<3x512xf32>
    %c495_i32 = arith.constant 495 : i32
    %74 = tpu.dynamic_rotate %0 by %c495_i32 dim 1 : vector<3x512xf32>, i32 -> vector<3x512xf32>
    %75 = arith.andi %12, %16 : vector<3x512xi1>
    %cst_14 = arith.constant 0.000000e+00 : f32
    %76 = vector.broadcast %cst_14 : f32 to vector<3x512xf32>
    %77 = arith.select %75, %74, %76 : vector<3x512xi1>, vector<3x512xf32>
    %78 = vector.extract_strided_slice %1 {offsets = [0, 8], sizes = [3, 1], strides = [1, 1]} : vector<3x9xf32> to vector<3x1xf32>
    %79 = vector.broadcast %78 : vector<3x1xf32> to vector<3x512xf32>
    %80 = arith.mulf %79, %77 : vector<3x512xf32>
    %81 = arith.addf %73, %80 : vector<3x512xf32>
    %c0_15 = arith.constant 0 : index
    %c0_16 = arith.constant 0 : index
    %82 = vector.load %arg3[%c0_15, %c0_16] : memref<1x4xf32, #tpu.memory_space<vmem>>, vector<1x4xf32>
    %83 = vector.extract_strided_slice %82 {offsets = [0, 0], sizes = [1, 3], strides = [1, 1]} : vector<1x4xf32> to vector<1x3xf32>
    %cst_17 = arith.constant dense<0.000000e+00> : vector<1x512xf32>
    %84 = tpu.matmul %83, %81, %cst_17 {dimension_numbers = #tpu.dot_dimension_numbers<[1], [0], [0], [1], [0, 0, 1, 1], [], []>} : vector<1x3xf32>, vector<3x512xf32>, vector<1x512xf32> -> vector<1x512xf32>
    %85 = vector.extract_strided_slice %82 {offsets = [0, 3], sizes = [1, 1], strides = [1, 1]} : vector<1x4xf32> to vector<1x1xf32>
    %86 = vector.broadcast %85 : vector<1x1xf32> to vector<1x512xf32>
    %87 = arith.addf %84, %86 : vector<1x512xf32>
    %cst_18 = arith.constant 0.000000e+00 : f32
    %88 = vector.broadcast %cst_18 : f32 to vector<1x512xf32>
    %89 = arith.maximumf %87, %88 : vector<1x512xf32>
    %c0_19 = arith.constant 0 : index
    %c0_20 = arith.constant 0 : index
    %90 = vector.load %arg4[%c0_19, %c0_20] : memref<1x512xf32, #tpu.memory_space<vmem>>, vector<1x512xf32>
    tpu.vector_store %arg4[%c0_19, %c0_20], %89 {strides = array<i32>} : memref<1x512xf32, #tpu.memory_space<vmem>>, vector<1x512xf32>,
    return
  }
  func.func @transform_0(%arg0: i32) -> (i32, i32) {
    %c0_i32 = arith.constant 0 : i32
    %c0_i32_0 = arith.constant 0 : i32
    %c0_i32_1 = arith.constant 0 : i32
    return %c0_i32, %c0_i32_0 : i32, i32
  }
  func.func @transform_1(%arg0: i32) -> (i32, i32) {
    %c0_i32 = arith.constant 0 : i32
    %c0_i32_0 = arith.constant 0 : i32
    %c0_i32_1 = arith.constant 0 : i32
    return %c0_i32, %c0_i32_0 : i32, i32
  }
  func.func @transform_2(%arg0: i32) -> (i32, i32) {
    %c0_i32 = arith.constant 0 : i32
    %c0_i32_0 = arith.constant 0 : i32
    %c0_i32_1 = arith.constant 0 : i32
    return %c0_i32, %c0_i32_0 : i32, i32
  }
  func.func @transform_3(%arg0: i32) -> (i32, i32) {
    %c0_i32 = arith.constant 0 : i32
    %c0_i32_0 = arith.constant 0 : i32
    %c0_i32_1 = arith.constant 0 : i32
    return %c0_i32, %c0_i32_0 : i32, i32
  }
}

</mosaic_0001>

<llo_original>
// kernel: tpu_custom_call.1
$region0: #{tpu_custom_call.1}
  #allocation0 [shape = 'u32[]', space=smem, size = 0x4, offset = 0x4, fixed_abs, tag = 'smem constant byte address 0x4 - core index']
  #allocation1 [shape = 'u32[144,128]{1,0:T(1,128)}', space=vmem, size = 0x12000, scoped, tag = 'internal scratch']
  %s0 = inlined_call_operand.hbm [shape: f32[3,512], index: 0, kind: input, shape index: {}]
  %s1 = inlined_call_operand.hbm [shape: f32[3,9], index: 1, kind: input, shape index: {}]
  %s2 = inlined_call_operand.vmem [shape: f32[1,4], index: 2, kind: input, shape index: {}]
  %s3 = inlined_call_operand.hbm [shape: f32[1,512], index: 3, kind: output, shape index: {}]
  %s4 = sld [smem:[#allocation0]]
  $region30: #{tpu_custom_call.1} parent=0
    _
  %s6 = ssub.s32 1, %s4
  %s7 = scalar_select 0, %s6, %s4
  $region1: #{tpu_custom_call.1} parent=0
    #allocation2 [shape = 'u8[8192]{0}', space=vmem, size = 0x2000, scoped, tag = 'input window, operand 0, single buffered']
    #allocation3 [shape = 's32[1]{0}', space=sflag, size = 0x4, scoped, tag = 'scoped memory for tpu_custom_call.1']
    #allocation4 [shape = 's32[1]{0}', space=sflag, size = 0x4, scoped, tag = 'scoped memory for tpu_custom_call.1']
    #allocation5 [shape = 'u8[2048]{0}', space=vmem, size = 0x800, scoped, tag = 'input window, operand 1, single buffered']
    #allocation6 [shape = 's32[1]{0}', space=sflag, size = 0x4, scoped, tag = 'scoped memory for tpu_custom_call.1']
    #allocation7 [shape = 'u8[2048]{0}', space=vmem, size = 0x800, scoped, tag = 'output window, operand 0, single buffered']
    %8 = vsyncpa [#allocation3], 0
    %9 = vsyncpa [#allocation6], 0
    %10 = vsyncpa [#allocation4], 0
    // Predicated region
    $region2: #{tpu_custom_call.1} parent=1 // pred_check
      _
    $region3: #{tpu_custom_call.1} parent=1 // pred_check_branch
      %12 = sbr.rel (0) target = $region5
    $region4: #{tpu_custom_call.1} parent=1 // pred_region
      %s14 = ssub.s32 256, 256
      %15 = vsyncadd [#allocation3], %s14
      %s17 = sshll.u32 [#allocation2], 4
      %s18 = int_to_ptr.vmem [resolvable:$true] %s17
      %20 = dma.hbm_to_vmem [thread:$0]  %s0, 256, %s18, [#allocation3]
    $region5: #{tpu_custom_call.1} parent=1 // pred_fallthru
      _
    // Predicated region
    $region6: #{tpu_custom_call.1} parent=1 // pred_check
      _
    $region7: #{tpu_custom_call.1} parent=1 // pred_check_branch
      %22 = sbr.rel (0) target = $region9
    $region8: #{tpu_custom_call.1} parent=1 // pred_region
      %s24 = ssub.s32 64, 64
      %25 = vsyncadd [#allocation6], %s24
      %s27 = sshll.u32 [#allocation5], 4
      %s28 = int_to_ptr.vmem [resolvable:$true] %s27
      %30 = dma.hbm_to_vmem [thread:$0]  %s1, 64, %s28, [#allocation6]
    $region9: #{tpu_custom_call.1} parent=1 // pred_fallthru
      _
    // Predicated region
    $region10: #{tpu_custom_call.1} parent=1 // pred_check
      _
    $region11: #{tpu_custom_call.1} parent=1 // pred_check_branch
      %32 = sbr.rel (0) target = $region13
    $region12: #{tpu_custom_call.1} parent=1 // pred_region
      _
    $region13: #{tpu_custom_call.1} parent=1 // pred_fallthru
      _
    // Predicated region
    $region14: #{tpu_custom_call.1} parent=1 // pred_check
      _
    $region15: #{tpu_custom_call.1} parent=1 // pred_check_branch
      %34 = sbr.rel (0) target = $region17
    $region16: #{tpu_custom_call.1} parent=1 // pred_region
      %35 = dma.done [#allocation3], 256
    $region17: #{tpu_custom_call.1} parent=1 // pred_fallthru
      _
    // Predicated region
    $region18: #{tpu_custom_call.1} parent=1 // pred_check
      _
    $region19: #{tpu_custom_call.1} parent=1 // pred_check_branch
      %37 = sbr.rel (0) target = $region21
    $region20: #{tpu_custom_call.1} parent=1 // pred_region
      %38 = dma.done [#allocation6], 64
    $region21: #{tpu_custom_call.1} parent=1 // pred_fallthru
      _
    %v39 = vld [vmem:[#allocation2] sm:$0x77]
    %v40 = vld [vmem:[#allocation2 + $0x8] sm:$0x77]
    %v41 = vld [vmem:[#allocation5] sm:$0x7]
    %v42 = vlaneseq
    %v43 = vand.u32 %v42, 127
    %v44 = vadd.s32 %v43, 128
    %v45 = vadd.s32 %v43, 256
    %v46 = vadd.s32 %v43, 384
    %v47 = vand.u32 %v43, 255
    %v48 = vand.u32 %v44, 255
    %v49 = vand.u32 %v45, 255
    %v50 = vand.u32 %v46, 255
    %v51 = vshra.s32 %v47, 4
    %v52 = vshra.s32 %v48, 4
    %v53 = vshra.s32 %v49, 4
    %v54 = vshra.s32 %v50, 4
    %v55 = vand.u32 %v47, 15
    %v56 = vand.u32 %v48, 15
    %v57 = vand.u32 %v49, 15
    %v58 = vand.u32 %v50, 15
    %vm59 = vcmp.ge.s32.totalorder %v51, 1
    %vm60 = vcmp.ge.s32.totalorder %v52, 1
    %vm61 = vcmp.ge.s32.totalorder %v53, 1
    %vm62 = vcmp.ge.s32.totalorder %v54, 1
    %vm63 = vcmp.le.s32.totalorder %v51, 14
    %vm64 = vcmp.le.s32.totalorder %v52, 14
    %vm65 = vcmp.le.s32.totalorder %v53, 14
    %vm66 = vcmp.le.s32.totalorder %v54, 14
    %vm67 = vcmp.ge.s32.totalorder %v55, 1
    %vm68 = vcmp.ge.s32.totalorder %v56, 1
    %vm69 = vcmp.ge.s32.totalorder %v57, 1
    %vm70 = vcmp.ge.s32.totalorder %v58, 1
    %vm71 = vcmp.le.s32.totalorder %v55, 14
    %vm72 = vcmp.le.s32.totalorder %v56, 14
    %vm73 = vcmp.le.s32.totalorder %v57, 14
    %vm74 = vcmp.le.s32.totalorder %v58, 14
    %v77 = vcombine.high %v39, %v39
    %v78 = vcombine.high %v40, %v40
    %81 = vrot.lane.b32.xlu0 %v39, 17
    %v82 = vpop.permute.xlu0 %81
    %83 = vrot.lane.b32.xlu0 %v77, 17
    %v84 = vpop.permute.xlu0 %83
    %85 = vrot.lane.b32.xlu0 %v40, 17
    %v86 = vpop.permute.xlu0 %85
    %87 = vrot.lane.b32.xlu0 %v78, 17
    %v88 = vpop.permute.xlu0 %87
    %vm89 = vcmp.lt.s32.totalorder %v43, 17
    %v90 = vsel %vm89, %v86, %v88
    %v91 = vsel %vm89, %v84, %v86
    %v92 = vsel %vm89, %v82, %v84
    %v93 = vsel %vm89, %v88, %v82
    %vm94 = vmand %vm59, %vm67
    %vm95 = vmand %vm60, %vm68
    %vm96 = vmand %vm61, %vm69
    %vm97 = vmand %vm62, %vm70
    %v98 = vsel %vm94, %v93, 0.0
    %v99 = vsel %vm95, %v92, 0.0
    %v100 = vsel %vm96, %v91, 0.0
    %v101 = vsel %vm97, %v90, 0.0
    %103 = vset.pattern.permute.xlu0 0
    %104 = vperm.xlu0 %103, %v41
    %v105 = vpop.permute.xlu0 %104
    %v107 = vmul.f32 %v105, %v98
    %v108 = vmul.f32 %v105, %v99
    %v109 = vmul.f32 %v105, %v100
    %v110 = vmul.f32 %v105, %v101
    %v111 = vadd.f32 %v107, 0.0
    %v112 = vadd.f32 %v108, 0.0
    %v113 = vadd.f32 %v109, 0.0
    %v114 = vadd.f32 %v110, 0.0
    %115 = vrot.lane.b32.xlu0 %v39, 16
    %v116 = vpop.permute.xlu0 %115
    %117 = vrot.lane.b32.xlu0 %v77, 16
    %v118 = vpop.permute.xlu0 %117
    %119 = vrot.lane.b32.xlu0 %v40, 16
    %v120 = vpop.permute.xlu0 %119
    %121 = vrot.lane.b32.xlu0 %v78, 16
    %v122 = vpop.permute.xlu0 %121
    %vm123 = vcmp.lt.s32.totalorder %v43, 16
    %v124 = vsel %vm123, %v120, %v122
    %v125 = vsel %vm123, %v118, %v120
    %v126 = vsel %vm123, %v116, %v118
    %v127 = vsel %vm123, %v122, %v116
    %v128 = vsel %vm59, %v127, 0.0
    %v129 = vsel %vm60, %v126, 0.0
    %v130 = vsel %vm61, %v125, 0.0
    %v131 = vsel %vm62, %v124, 0.0
    %132 = vset.pattern.permute.xlu0 1
    %133 = vperm.xlu0 %132, %v41
    %v134 = vpop.permute.xlu0 %133
    %v136 = vmul.f32 %v134, %v128
    %v137 = vmul.f32 %v134, %v129
    %v138 = vmul.f32 %v134, %v130
    %v139 = vmul.f32 %v134, %v131
    %v140 = vadd.f32 %v111, %v136
    %v141 = vadd.f32 %v112, %v137
    %v142 = vadd.f32 %v113, %v138
    %v143 = vadd.f32 %v114, %v139
    %144 = vrot.lane.b32.xlu0 %v39, 15
    %v145 = vpop.permute.xlu0 %144
    %146 = vrot.lane.b32.xlu0 %v77, 15
    %v147 = vpop.permute.xlu0 %146
    %148 = vrot.lane.b32.xlu0 %v40, 15
    %v149 = vpop.permute.xlu0 %148
    %150 = vrot.lane.b32.xlu0 %v78, 15
    %v151 = vpop.permute.xlu0 %150
    %vm152 = vcmp.lt.s32.totalorder %v43, 15
    %v153 = vsel %vm152, %v149, %v151
    %v154 = vsel %vm152, %v147, %v149
    %v155 = vsel %vm152, %v145, %v147
    %v156 = vsel %vm152, %v151, %v145
    %vm157 = vmand %vm59, %vm71
    %vm158 = vmand %vm60, %vm72
    %vm159 = vmand %vm61, %vm73
    %vm160 = vmand %vm62, %vm74
    %v161 = vsel %vm157, %v156, 0.0
    %v162 = vsel %vm158, %v155, 0.0
    %v163 = vsel %vm159, %v154, 0.0
    %v164 = vsel %vm160, %v153, 0.0
    %165 = vset.pattern.permute.xlu0 2
    %166 = vperm.xlu0 %165, %v41
    %v167 = vpop.permute.xlu0 %166
    %v169 = vmul.f32 %v167, %v161
    %v170 = vmul.f32 %v167, %v162
    %v171 = vmul.f32 %v167, %v163
    %v172 = vmul.f32 %v167, %v164
    %v173 = vadd.f32 %v140, %v169
    %v174 = vadd.f32 %v141, %v170
    %v175 = vadd.f32 %v142, %v171
    %v176 = vadd.f32 %v143, %v172
    %177 = vrot.lane.b32.xlu0 %v39, 1
    %v178 = vpop.permute.xlu0 %177
    %179 = vrot.lane.b32.xlu0 %v77, 1
    %v180 = vpop.permute.xlu0 %179
    %181 = vrot.lane.b32.xlu0 %v40, 1
    %v182 = vpop.permute.xlu0 %181
    %183 = vrot.lane.b32.xlu0 %v78, 1
    %v184 = vpop.permute.xlu0 %183
    %vm185 = vcmp.lt.s32.totalorder %v43, 1
    %v186 = vsel %vm185, %v182, %v184
    %v187 = vsel %vm185, %v180, %v182
    %v188 = vsel %vm185, %v178, %v180
    %v189 = vsel %vm185, %v184, %v178
    %v190 = vsel %vm67, %v189, 0.0
    %v191 = vsel %vm68, %v188, 0.0
    %v192 = vsel %vm69, %v187, 0.0
    %v193 = vsel %vm70, %v186, 0.0
    %194 = vset.pattern.permute.xlu0 3
    %195 = vperm.xlu0 %194, %v41
    %v196 = vpop.permute.xlu0 %195
    %v198 = vmul.f32 %v196, %v190
    %v199 = vmul.f32 %v196, %v191
    %v200 = vmul.f32 %v196, %v192
    %v201 = vmul.f32 %v196, %v193
    %v202 = vadd.f32 %v173, %v198
    %v203 = vadd.f32 %v174, %v199
    %v204 = vadd.f32 %v175, %v200
    %v205 = vadd.f32 %v176, %v201
    %206 = vset.pattern.permute.xlu0 4
    %207 = vperm.xlu0 %206, %v41
    %v208 = vpop.permute.xlu0 %207
    %v210 = vmul.f32 %v208, %v39
    %v211 = vmul.f32 %v208, %v77
    %v212 = vmul.f32 %v208, %v40
    %v213 = vmul.f32 %v208, %v78
    %v214 = vadd.f32 %v202, %v210
    %v215 = vadd.f32 %v203, %v211
    %v216 = vadd.f32 %v204, %v212
    %v217 = vadd.f32 %v205, %v213
    %218 = vrot.lane.b32.xlu0 %v39, 127
    %v219 = vpop.permute.xlu0 %218
    %220 = vrot.lane.b32.xlu0 %v77, 127
    %v221 = vpop.permute.xlu0 %220
    %222 = vrot.lane.b32.xlu0 %v40, 127
    %v223 = vpop.permute.xlu0 %222
    %224 = vrot.lane.b32.xlu0 %v78, 127
    %v225 = vpop.permute.xlu0 %224
    %vm226 = vcmp.lt.s32.totalorder %v43, 127
    %v227 = vsel %vm226, %v223, %v225
    %v228 = vsel %vm226, %v221, %v223
    %v229 = vsel %vm226, %v219, %v221
    %v230 = vsel %vm226, %v225, %v219
    %v231 = vsel %vm71, %v229, 0.0
    %v232 = vsel %vm72, %v228, 0.0
    %v233 = vsel %vm73, %v227, 0.0
    %v234 = vsel %vm74, %v230, 0.0
    %235 = vset.pattern.permute.xlu0 5
    %236 = vperm.xlu0 %235, %v41
    %v237 = vpop.permute.xlu0 %236
    %v239 = vmul.f32 %v237, %v231
    %v240 = vmul.f32 %v237, %v232
    %v241 = vmul.f32 %v237, %v233
    %v242 = vmul.f32 %v237, %v234
    %v243 = vadd.f32 %v214, %v239
    %v244 = vadd.f32 %v215, %v240
    %v245 = vadd.f32 %v216, %v241
    %v246 = vadd.f32 %v217, %v242
    %247 = vrot.lane.b32.xlu0 %v39, 113
    %v248 = vpop.permute.xlu0 %247
    %249 = vrot.lane.b32.xlu0 %v77, 113
    %v250 = vpop.permute.xlu0 %249
    %251 = vrot.lane.b32.xlu0 %v40, 113
    %v252 = vpop.permute.xlu0 %251
    %253 = vrot.lane.b32.xlu0 %v78, 113
    %v254 = vpop.permute.xlu0 %253
    %vm255 = vcmp.lt.s32.totalorder %v43, 113
    %v256 = vsel %vm255, %v252, %v254
    %v257 = vsel %vm255, %v250, %v252
    %v258 = vsel %vm255, %v248, %v250
    %v259 = vsel %vm255, %v254, %v248
    %vm260 = vmand %vm63, %vm67
    %vm261 = vmand %vm64, %vm68
    %vm262 = vmand %vm65, %vm69
    %vm263 = vmand %vm66, %vm70
    %v264 = vsel %vm260, %v258, 0.0
    %v265 = vsel %vm261, %v257, 0.0
    %v266 = vsel %vm262, %v256, 0.0
    %v267 = vsel %vm263, %v259, 0.0
    %268 = vset.pattern.permute.xlu0 6
    %269 = vperm.xlu0 %268, %v41
    %v270 = vpop.permute.xlu0 %269
    %v272 = vmul.f32 %v270, %v264
    %v273 = vmul.f32 %v270, %v265
    %v274 = vmul.f32 %v270, %v266
    %v275 = vmul.f32 %v270, %v267
    %v276 = vadd.f32 %v243, %v272
    %v277 = vadd.f32 %v244, %v273
    %v278 = vadd.f32 %v245, %v274
    %v279 = vadd.f32 %v246, %v275
    %280 = vrot.lane.b32.xlu0 %v39, 112
    %v281 = vpop.permute.xlu0 %280
    %282 = vrot.lane.b32.xlu0 %v77, 112
    %v283 = vpop.permute.xlu0 %282
    %284 = vrot.lane.b32.xlu0 %v40, 112
    %v285 = vpop.permute.xlu0 %284
    %286 = vrot.lane.b32.xlu0 %v78, 112
    %v287 = vpop.permute.xlu0 %286
    %vm288 = vcmp.lt.s32.totalorder %v43, 112
    %v289 = vsel %vm288, %v285, %v287
    %v290 = vsel %vm288, %v283, %v285
    %v291 = vsel %vm288, %v281, %v283
    %v292 = vsel %vm288, %v287, %v281
    %v293 = vsel %vm63, %v291, 0.0
    %v294 = vsel %vm64, %v290, 0.0
    %v295 = vsel %vm65, %v289, 0.0
    %v296 = vsel %vm66, %v292, 0.0
    %297 = vset.pattern.permute.xlu0 7
    %298 = vperm.xlu0 %297, %v41
    %v299 = vpop.permute.xlu0 %298
    %v301 = vmul.f32 %v299, %v293
    %v302 = vmul.f32 %v299, %v294
    %v303 = vmul.f32 %v299, %v295
    %v304 = vmul.f32 %v299, %v296
    %v305 = vadd.f32 %v276, %v301
    %v306 = vadd.f32 %v277, %v302
    %v307 = vadd.f32 %v278, %v303
    %v308 = vadd.f32 %v279, %v304
    %309 = vrot.lane.b32.xlu0 %v39, 111
    %v310 = vpop.permute.xlu0 %309
    %311 = vrot.lane.b32.xlu0 %v77, 111
    %v312 = vpop.permute.xlu0 %311
    %313 = vrot.lane.b32.xlu0 %v40, 111
    %v314 = vpop.permute.xlu0 %313
    %315 = vrot.lane.b32.xlu0 %v78, 111
    %v316 = vpop.permute.xlu0 %315
    %vm317 = vcmp.lt.s32.totalorder %v43, 111
    %v318 = vsel %vm317, %v314, %v316
    %v319 = vsel %vm317, %v312, %v314
    %v320 = vsel %vm317, %v310, %v312
    %v321 = vsel %vm317, %v316, %v310
    %vm322 = vmand %vm63, %vm71
    %vm323 = vmand %vm64, %vm72
    %vm324 = vmand %vm65, %vm73
    %vm325 = vmand %vm66, %vm74
    %v326 = vsel %vm322, %v320, 0.0
    %v327 = vsel %vm323, %v319, 0.0
    %v328 = vsel %vm324, %v318, 0.0
    %v329 = vsel %vm325, %v321, 0.0
    %330 = vset.pattern.permute.xlu0 8
    %331 = vperm.xlu0 %330, %v41
    %v332 = vpop.permute.xlu0 %331
    %v334 = vmul.f32 %v332, %v326
    %v335 = vmul.f32 %v332, %v327
    %v336 = vmul.f32 %v332, %v328
    %v337 = vmul.f32 %v332, %v329
    %v338 = vadd.f32 %v305, %v334
    %v339 = vadd.f32 %v306, %v335
    %v340 = vadd.f32 %v307, %v336
    %v341 = vadd.f32 %v308, %v337
    %v342 = vld [vmem:[%s2] sm:$0x1]
    %344 = vset.pattern.permute.xlu0 3
    %345 = vperm.xlu0 %344, %v342
    %v346 = vpop.permute.xlu0 %345
    %v348 = vlaneseq
    %v349 = vshrl.u32 %v348, 7
    %v350 = vsub.s32 0, %v349
    %v351 = vrot.slane %v346, %v350
    %vm352 = vcmask 23552
    %v353 = vsel %vm352, %v342, 0
    %vm355 = vcmask 1042432
    %v357 = vsel %vm355, %v338, 0
    %v360 = vsel %vm355, %v339, 0
    %v363 = vsel %vm355, %v340, 0
    %v366 = vsel %vm355, %v341, 0
    %368 = vmatprep.subr.mxu0 0.0
    %369 = vmatpush1.msra.mxu0 0.0
    %370 = vmatprep.subr.mxu0 0.0
    %371 = vmatpush1.msra.mxu0 0.0
    %372 = vmatprep.subr.mxu0 0.0
    %373 = vmatpush1.msra.mxu0 0.0
    %374 = vmatprep.subr.mxu0 0.0
    %375 = vmatpush1.msra.mxu0 0.0
    %376 = vmatprep.subr.mxu0 0.0
    %377 = vmatpush1.msra.mxu0 0.0
    %378 = vmatprep.subr.mxu0 0.0
    %379 = vmatpush1.msra.mxu0 0.0
    %380 = vmatprep.subr.mxu0 0.0
    %381 = vmatpush1.msra.mxu0 0.0
    %382 = vmatprep.subr.mxu0 0.0
    %383 = vmatpush1.msra.mxu0 0.0
    %384 = vmatprep.subr.mxu0 0.0
    %385 = vmatpush1.msra.mxu0 0.0
    %386 = vmatprep.subr.mxu0 0.0
    %387 = vmatpush1.msra.mxu0 0.0
    %388 = vmatprep.subr.mxu0 0.0
    %389 = vmatpush1.msra.mxu0 0.0
    %390 = vmatprep.subr.mxu0 0.0
    %391 = vmatpush1.msra.mxu0 0.0
    %392 = vmatprep.subr.mxu0 0.0
    %393 = vmatpush1.msra.mxu0 0.0
    %394 = vmatprep.subr.mxu0 0.0
    %395 = vmatpush1.msra.mxu0 0.0
    %396 = vmatprep.subr.mxu0 0.0
    %397 = vmatpush1.msra.mxu0 0.0
    %398 = vmatprep.subr.mxu0 %v360
    %399 = vmatpush1.msra.mxu0 %v357
    %400 = vmatprep.subr.mxu0 0.0
    %401 = vmatpush2.msra.mxu0 0.0
    %402 = vmatprep.subr.mxu0 0.0
    %403 = vmatpush2.msra.mxu0 0.0
    %404 = vmatprep.subr.mxu0 0.0
    %405 = vmatpush2.msra.mxu0 0.0
    %406 = vmatprep.subr.mxu0 0.0
    %407 = vmatpush2.msra.mxu0 0.0
    %408 = vmatprep.subr.mxu0 0.0
    %409 = vmatpush2.msra.mxu0 0.0
    %410 = vmatprep.subr.mxu0 0.0
    %411 = vmatpush2.msra.mxu0 0.0
    %412 = vmatprep.subr.mxu0 0.0
    %413 = vmatpush2.msra.mxu0 0.0
    %414 = vmatprep.subr.mxu0 0.0
    %415 = vmatpush2.msra.mxu0 0.0
    %416 = vmatprep.subr.mxu0 0.0
    %417 = vmatpush2.msra.mxu0 0.0
    %418 = vmatprep.subr.mxu0 0.0
    %419 = vmatpush2.msra.mxu0 0.0
    %420 = vmatprep.subr.mxu0 0.0
    %421 = vmatpush2.msra.mxu0 0.0
    %422 = vmatprep.subr.mxu0 0.0
    %423 = vmatpush2.msra.mxu0 0.0
    %424 = vmatprep.subr.mxu0 0.0
    %425 = vmatpush2.msra.mxu0 0.0
    %426 = vmatprep.subr.mxu0 0.0
    %427 = vmatpush2.msra.mxu0 0.0
    %428 = vmatprep.subr.mxu0 0.0
    %429 = vmatpush2.msra.mxu0 0.0
    %430 = vmatprep.subr.mxu0 0.0
    %431 = vmatpush2.msra.mxu0 0.0
    %432 = vmatprep.mubr.f32.mxu0 0.0
    %433 = vmatmul.mubr.f32.gmra.mxu0 %v353
    %v434 = vpop.f32.mrf.mxu0
    %v435 = vadd.f32 %v351, %v434
    %v436 = vpop.f32.mrf.mxu0
    %v437 = vadd.f32 %v351, %v436
    %438 = vdwg.mxu0
    %439 = vmatprep.subr.mxu0 0.0
    %440 = vmatpush1.msra.mxu0 0.0
    %441 = vmatprep.subr.mxu0 0.0
    %442 = vmatpush1.msra.mxu0 0.0
    %443 = vmatprep.subr.mxu0 0.0
    %444 = vmatpush1.msra.mxu0 0.0
    %445 = vmatprep.subr.mxu0 0.0
    %446 = vmatpush1.msra.mxu0 0.0
    %447 = vmatprep.subr.mxu0 0.0
    %448 = vmatpush1.msra.mxu0 0.0
    %449 = vmatprep.subr.mxu0 0.0
    %450 = vmatpush1.msra.mxu0 0.0
    %451 = vmatprep.subr.mxu0 0.0
    %452 = vmatpush1.msra.mxu0 0.0
    %453 = vmatprep.subr.mxu0 0.0
    %454 = vmatpush1.msra.mxu0 0.0
    %455 = vmatprep.subr.mxu0 0.0
    %456 = vmatpush1.msra.mxu0 0.0
    %457 = vmatprep.subr.mxu0 0.0
    %458 = vmatpush1.msra.mxu0 0.0
    %459 = vmatprep.subr.mxu0 0.0
    %460 = vmatpush1.msra.mxu0 0.0
    %461 = vmatprep.subr.mxu0 0.0
    %462 = vmatpush1.msra.mxu0 0.0
    %463 = vmatprep.subr.mxu0 0.0
    %464 = vmatpush1.msra.mxu0 0.0
    %465 = vmatprep.subr.mxu0 0.0
    %466 = vmatpush1.msra.mxu0 0.0
    %467 = vmatprep.subr.mxu0 0.0
    %468 = vmatpush1.msra.mxu0 0.0
    %469 = vmatprep.subr.mxu0 %v366
    %470 = vmatpush1.msra.mxu0 %v363
    %471 = vmatprep.subr.mxu0 0.0
    %472 = vmatpush2.msra.mxu0 0.0
    %473 = vmatprep.subr.mxu0 0.0
    %474 = vmatpush2.msra.mxu0 0.0
    %475 = vmatprep.subr.mxu0 0.0
    %476 = vmatpush2.msra.mxu0 0.0
    %477 = vmatprep.subr.mxu0 0.0
    %478 = vmatpush2.msra.mxu0 0.0
    %479 = vmatprep.subr.mxu0 0.0
    %480 = vmatpush2.msra.mxu0 0.0
    %481 = vmatprep.subr.mxu0 0.0
    %482 = vmatpush2.msra.mxu0 0.0
    %483 = vmatprep.subr.mxu0 0.0
    %484 = vmatpush2.msra.mxu0 0.0
    %485 = vmatprep.subr.mxu0 0.0
    %486 = vmatpush2.msra.mxu0 0.0
    %487 = vmatprep.subr.mxu0 0.0
    %488 = vmatpush2.msra.mxu0 0.0
    %489 = vmatprep.subr.mxu0 0.0
    %490 = vmatpush2.msra.mxu0 0.0
    %491 = vmatprep.subr.mxu0 0.0
    %492 = vmatpush2.msra.mxu0 0.0
    %493 = vmatprep.subr.mxu0 0.0
    %494 = vmatpush2.msra.mxu0 0.0
    %495 = vmatprep.subr.mxu0 0.0
    %496 = vmatpush2.msra.mxu0 0.0
    %497 = vmatprep.subr.mxu0 0.0
    %498 = vmatpush2.msra.mxu0 0.0
    %499 = vmatprep.subr.mxu0 0.0
    %500 = vmatpush2.msra.mxu0 0.0
    %501 = vmatprep.subr.mxu0 0.0
    %502 = vmatpush2.msra.mxu0 0.0
    %503 = vmatprep.mubr.f32.mxu0 0.0
    %504 = vmatmul.mubr.f32.gmra.mxu0 %v353
    %v505 = vpop.f32.mrf.mxu0
    %v506 = vadd.f32 %v351, %v505
    %v507 = vpop.f32.mrf.mxu0
    %v508 = vadd.f32 %v351, %v507
    %509 = vdwg.mxu0
    %v510 = vmax.f32 %v435, 0.0
    %v511 = vmax.f32 %v437, 0.0
    %v512 = vmax.f32 %v506, 0.0
    %v513 = vmax.f32 %v508, 0.0
    %v518 = vcombine.low %v510, %v511
    %v519 = vcombine.low %v512, %v513
    %v521 = vunpack.c.l.s4 1966171168
    %v522 = vunpack.c.0.s8 %v521
    %v523 = vlaneseq
    %v524 = vshrl.u32 %v523, 7
    %v525 = vsub.s32 %v522, %v524
    %v526 = vrot.slane %v518, %v525
    %v528 = vunpack.c.l.s4 1966171168
    %v529 = vunpack.c.0.s8 %v528
    %v530 = vlaneseq
    %v531 = vshrl.u32 %v530, 7
    %v532 = vsub.s32 %v529, %v531
    %v533 = vrot.slane %v519, %v532
    %v534 = vcombine.low %v526, %v533
    %v536 = vunpack.c.l.s4 1966171168
    %v537 = vunpack.c.0.s8 %v536
    %v538 = vlaneseq
    %v539 = vshrl.u32 %v538, 7
    %v540 = vsub.s32 %v537, %v539
    %v541 = vrot.slane %v534, %v540
    %v543 = vlaneseq
    %vm544 = vcmp.ge.s32.totalorder %v543, 0
    %vm545 = vcmp.lt.s32.totalorder %v543, 512
    %vm546 = vmand %vm544, %vm545
    %547 = vst.msk [vmem:[#allocation7] sm:$0xf] %vm546, %v541
    // Predicated region
    $region22: #{tpu_custom_call.1} parent=1 // pred_check
      _
    $region23: #{tpu_custom_call.1} parent=1 // pred_check_branch
      %549 = sbr.rel (0) target = $region25
    $region24: #{tpu_custom_call.1} parent=1 // pred_region
      %s551 = ssub.s32 64, 64
      %552 = vsyncadd [#allocation4], %s551
      %s554 = sshll.u32 [#allocation7], 4
      %s555 = int_to_ptr.vmem [resolvable:$true] %s554
      %557 = dma.vmem_to_hbm [thread:$0]  %s555, 64, %s3, [#allocation4]
    $region25: #{tpu_custom_call.1} parent=1 // pred_fallthru
      _
    // Predicated region
    $region26: #{tpu_custom_call.1} parent=1 // pred_check
      _
    $region27: #{tpu_custom_call.1} parent=1 // pred_check_branch
      %559 = sbr.rel (0) target = $region29
    $region28: #{tpu_custom_call.1} parent=1 // pred_region
      %560 = dma.done [#allocation4], 64
    $region29: #{tpu_custom_call.1} parent=1 // pred_fallthru
      _
    %561 = vsyncpa [#allocation3], 1
    %562 = vsyncpa [#allocation6], 1
    %563 = vsyncpa [#allocation4], 1

</llo_original>
